<compile_context>
chip_gen: v6e
topology: v6e:2x2x1
jax: 0.10.0
libtpu: 0.0.40
codegen_flags: <defaults>
</compile_context>

<pallas_src>
import functools

import jax
import jax.numpy as jnp
import numpy as np
from jax.experimental import pallas as pl
from jax.experimental.pallas import tpu as pltpu

VOCAB_SIZE = 256
EMBEDDING_DIM = 32
CONTEXT_SIZE = 4
HIDDEN = 128          # fixed by the module definition (linear1 -> 128)
BATCH_TILE = 8        # contexts processed per grid step (sublane-aligned)


def _ngram_kernel(batch_tile, context_size, embedding_dim,
                  idx_ref,      # SMEM (Bp, C) int32   (scalar-prefetched)
                  emb_ref,      # VMEM (V, E)
                  w1_ref,       # VMEM (C*E, H)
                  b1_ref,       # VMEM (1, H)
                  w2_ref,       # VMEM (H, V)
                  b2_ref,       # VMEM (1, V)
                  logp_ref,     # VMEM out (BT, V)
                  embeds_ref):  # VMEM out (BT, C*E)  lane-dense
    base = pl.program_id(0) * batch_tile

    # Gather the C embedding rows for each of the BT contexts handled by this
    # grid step and lay them out lane-dense as (BT, C*E).
    def gather_row(j):
        parts = [emb_ref[pl.ds(idx_ref[base + j, i], 1), :]
                 for i in range(context_size)]
        return jnp.concatenate(parts, axis=1)            # (1, C*E)

    x = jnp.concatenate([gather_row(j) for j in range(batch_tile)], axis=0)
    embeds_ref[...] = x                                   # full-width store

    # linear1 + ReLU: one fused K = C*E MXU dot instead of C tiny K=E dots.
    h = jnp.dot(x, w1_ref[...], preferred_element_type=jnp.float32) + b1_ref[...]
    h = jnp.maximum(h, 0.0)                                # (BT, H)

    # linear2
    logits = jnp.dot(h, w2_ref[...],
                     preferred_element_type=jnp.float32) + b2_ref[...]   # (BT, V)

    # numerically-stable log_softmax along the vocab axis
    m = jnp.max(logits, axis=-1, keepdims=True)
    lse = jnp.log(jnp.sum(jnp.exp(logits - m), axis=-1, keepdims=True)) + m
    logp_ref[...] = logits - lse


def prepare_params(emb_table, w1, b1, w2, b2):
    """Convert torch-layout params to kernel layout ONCE (hoisted out of the
    per-call path): Linear weights (out,in) -> (in,out), biases -> (1,N)."""
    return dict(
        emb=jnp.asarray(emb_table, jnp.float32),           # (V, E)
        w1=jnp.asarray(w1, jnp.float32).T,                 # (C*E, H)
        b1=jnp.asarray(b1, jnp.float32).reshape(1, -1),    # (1, H)
        w2=jnp.asarray(w2, jnp.float32).T,                 # (H, V)
        b2=jnp.asarray(b2, jnp.float32).reshape(1, -1),    # (1, V)
    )


def ngram_forward(inputs, params, *, batch_tile=BATCH_TILE):
    """inputs: (C,) or (B, C) int32 context indices.
    Returns (log_probs, embeds): ((1,V),(1,C*E)) for a single context
    (matching torch), or ((B,V),(B,C*E)) for a batch of contexts."""
    emb, w1, b1, w2, b2 = (params["emb"], params["w1"], params["b1"],
                           params["w2"], params["b2"])
    idx = jnp.asarray(inputs, jnp.int32)
    if idx.ndim == 1:
        idx = idx[None, :]
    B, C = idx.shape
    V, E = emb.shape
    H = w1.shape[1]

    # Pad the batch to a multiple of the batch tile (sublane alignment).
    Bp = ((B + batch_tile - 1) // batch_tile) * batch_tile
    if Bp != B:
        idx = jnp.pad(idx, ((0, Bp - B), (0, 0)))
    num_steps = Bp // batch_tile

    kernel = functools.partial(_ngram_kernel, batch_tile, C, E)

    flops = 2 * Bp * (C * E * H + H * V)
    bytes_accessed = 4 * (V * E + C * E * H + H + H * V + V
                          + Bp * C + Bp * V + Bp * C * E)

    log_probs, embeds = pl.pallas_call(
        kernel,
        out_shape=(
            jax.ShapeDtypeStruct((Bp, V), jnp.float32),
            jax.ShapeDtypeStruct((Bp, C * E), jnp.float32),
        ),
        grid_spec=pltpu.PrefetchScalarGridSpec(
            num_scalar_prefetch=1,
            grid=(num_steps,),
            in_specs=[
                pl.BlockSpec((V, E), lambda g, idx: (0, 0)),          # emb table
                pl.BlockSpec((C * E, H), lambda g, idx: (0, 0)),      # w1
                pl.BlockSpec((1, H), lambda g, idx: (0, 0)),          # b1
                pl.BlockSpec((H, V), lambda g, idx: (0, 0)),          # w2
                pl.BlockSpec((1, V), lambda g, idx: (0, 0)),          # b2
            ],
            out_specs=(
                pl.BlockSpec((batch_tile, V), lambda g, idx: (g, 0)),
                pl.BlockSpec((batch_tile, C * E), lambda g, idx: (g, 0)),
            ),
        ),
        compiler_params=pltpu.CompilerParams(
            dimension_semantics=("parallel",)),
        cost_estimate=pl.CostEstimate(
            flops=flops, transcendentals=Bp * V,
            bytes_accessed=bytes_accessed),
    )(idx, emb, w1, b1, w2, b2)

    if Bp != B:
        log_probs = log_probs[:B]
        embeds = embeds[:B]
    return log_probs, embeds


def _reference_forward(idx_batch, emb_table, w1, b1, w2, b2):
    """Pure-JAX reference mirroring the torch module (per row)."""
    embeds = emb_table[idx_batch].reshape(idx_batch.shape[0], -1)
    h = jnp.maximum(embeds @ w1.T + b1, 0.0)
    logits = h @ w2.T + b2
    return jax.nn.log_softmax(logits, axis=-1), embeds


if __name__ == "__main__":
    key = jax.random.PRNGKey(0)
    k_emb, k_w1, k_b1, k_w2, k_b2, k_idx = jax.random.split(key, 6)

    # Deterministic synthetic parameters in torch Linear layout (out, in).
    emb_table = 0.1 * jax.random.normal(k_emb, (VOCAB_SIZE, EMBEDDING_DIM),
                                        jnp.float32)
    w1 = 0.1 * jax.random.normal(k_w1, (HIDDEN, CONTEXT_SIZE * EMBEDDING_DIM),
                                 jnp.float32)
    b1 = 0.1 * jax.random.normal(k_b1, (HIDDEN,), jnp.float32)
    w2 = 0.1 * jax.random.normal(k_w2, (VOCAB_SIZE, HIDDEN), jnp.float32)
    b2 = 0.1 * jax.random.normal(k_b2, (VOCAB_SIZE,), jnp.float32)

    # Layout conversion done once, outside the forward call.
    params = prepare_params(emb_table, w1, b1, w2, b2)

    # Batched forward: 16 contexts -> grid=(2,) parallel steps.
    B = 16
    idx_batch = jax.random.randint(k_idx, (B, CONTEXT_SIZE), 0, VOCAB_SIZE,
                                   dtype=jnp.int32)
    log_probs_b, embeds_b = ngram_forward(idx_batch, params)
    jax.block_until_ready((log_probs_b, embeds_b))

    ref_lp_b, ref_emb_b = _reference_forward(idx_batch, emb_table, w1, b1, w2, b2)
    np.testing.assert_allclose(np.asarray(embeds_b), np.asarray(ref_emb_b),
                               rtol=1e-5, atol=1e-5)
    np.testing.assert_allclose(np.asarray(log_probs_b), np.asarray(ref_lp_b),
                               rtol=1e-4, atol=1e-4)

    # Single-context forward, exactly matching the torch module's signature.
    inputs = idx_batch[0]                                  # (C,)
    log_probs, embeds = ngram_forward(inputs, params)
    jax.block_until_ready((log_probs, embeds))
    assert log_probs.shape == (1, VOCAB_SIZE)
    assert embeds.shape == (1, CONTEXT_SIZE * EMBEDDING_DIM)
    np.testing.assert_allclose(np.asarray(log_probs), np.asarray(ref_lp_b[:1]),
                               rtol=1e-4, atol=1e-4)
    np.testing.assert_allclose(np.asarray(embeds), np.asarray(ref_emb_b[:1]),
                               rtol=1e-5, atol=1e-5)

    print("KERNEL_OK")
</pallas_src>

<mosaic_0001>
module attributes {stable_mosaic.version = 11 : i64} {
  func.func @_ngram_kernel(%arg0: i32, %arg1: memref<16x4xi32, #tpu.memory_space<smem>>, %arg2: memref<256x32xf32, #tpu.memory_space<vmem>>, %arg3: memref<128x128xf32, #tpu.memory_space<vmem>>, %arg4: memref<1x128xf32, #tpu.memory_space<vmem>>, %arg5: memref<128x256xf32, #tpu.memory_space<vmem>>, %arg6: memref<1x256xf32, #tpu.memory_space<vmem>>, %arg7: memref<8x256xf32, #tpu.memory_space<vmem>>, %arg8: memref<8x128xf32, #tpu.memory_space<vmem>>) attributes {dimension_semantics = [#tpu.dimension_semantics<parallel>], iteration_bounds = array<i64: 2>, scalar_prefetch = 1 : i64, scratch_operands = 0 : i64, tpu.core_type = #tpu.core_type<tc>, window_params = [{pipeline_mode = #tpu.pipeline_mode<synchronous>, transform_indices = @transform_0, window_bounds = array<i64: 256, 32>}, {pipeline_mode = #tpu.pipeline_mode<synchronous>, transform_indices = @transform_1, window_bounds = array<i64: 128, 128>}, {pipeline_mode = #tpu.pipeline_mode<synchronous>, transform_indices = @transform_2, window_bounds = array<i64: 1, 128>}, {pipeline_mode = #tpu.pipeline_mode<synchronous>, transform_indices = @transform_3, window_bounds = array<i64: 128, 256>}, {pipeline_mode = #tpu.pipeline_mode<synchronous>, transform_indices = @transform_4, window_bounds = array<i64: 1, 256>}, {transform_indices = @transform_5, window_bounds = array<i64: 8, 256>}, {transform_indices = @transform_6, window_bounds = array<i64: 8, 128>}]} {
    %c8_i32 = arith.constant 8 : i32
    %0 = arith.muli %arg0, %c8_i32 : i32
    %c0_i32 = arith.constant 0 : i32
    %1 = arith.addi %0, %c0_i32 : i32
    %2 = arith.index_cast %1 : i32 to index
    %c0 = arith.constant 0 : index
    %3 = memref.load %arg1[%2, %c0] : memref<16x4xi32, #tpu.memory_space<smem>>
    %4 = arith.index_cast %3 : i32 to index
    %c0_0 = arith.constant 0 : index
    %5 = vector.load %arg2[%4, %c0_0] : memref<256x32xf32, #tpu.memory_space<vmem>>, vector<1x32xf32>
    %c0_i32_1 = arith.constant 0 : i32
    %6 = arith.addi %0, %c0_i32_1 : i32
    %7 = arith.index_cast %6 : i32 to index
    %c1 = arith.constant 1 : index
    %8 = memref.load %arg1[%7, %c1] : memref<16x4xi32, #tpu.memory_space<smem>>
    %9 = arith.index_cast %8 : i32 to index
    %c0_2 = arith.constant 0 : index
    %10 = vector.load %arg2[%9, %c0_2] : memref<256x32xf32, #tpu.memory_space<vmem>>, vector<1x32xf32>
    %c0_i32_3 = arith.constant 0 : i32
    %11 = arith.addi %0, %c0_i32_3 : i32
    %12 = arith.index_cast %11 : i32 to index
    %c2 = arith.constant 2 : index
    %13 = memref.load %arg1[%12, %c2] : memref<16x4xi32, #tpu.memory_space<smem>>
    %14 = arith.index_cast %13 : i32 to index
    %c0_4 = arith.constant 0 : index
    %15 = vector.load %arg2[%14, %c0_4] : memref<256x32xf32, #tpu.memory_space<vmem>>, vector<1x32xf32>
    %c0_i32_5 = arith.constant 0 : i32
    %16 = arith.addi %0, %c0_i32_5 : i32
    %17 = arith.index_cast %16 : i32 to index
    %c3 = arith.constant 3 : index
    %18 = memref.load %arg1[%17, %c3] : memref<16x4xi32, #tpu.memory_space<smem>>
    %19 = arith.index_cast %18 : i32 to index
    %c0_6 = arith.constant 0 : index
    %20 = vector.load %arg2[%19, %c0_6] : memref<256x32xf32, #tpu.memory_space<vmem>>, vector<1x32xf32>
    %21 = tpu.concatenate %5, %10, %15, %20 in 1 : vector<1x32xf32>, vector<1x32xf32>, vector<1x32xf32>, vector<1x32xf32> -> vector<1x128xf32>
    %c1_i32 = arith.constant 1 : i32
    %22 = arith.addi %0, %c1_i32 : i32
    %23 = arith.index_cast %22 : i32 to index
    %c0_7 = arith.constant 0 : index
    %24 = memref.load %arg1[%23, %c0_7] : memref<16x4xi32, #tpu.memory_space<smem>>
    %25 = arith.index_cast %24 : i32 to index
    %c0_8 = arith.constant 0 : index
    %26 = vector.load %arg2[%25, %c0_8] : memref<256x32xf32, #tpu.memory_space<vmem>>, vector<1x32xf32>
    %c1_i32_9 = arith.constant 1 : i32
    %27 = arith.addi %0, %c1_i32_9 : i32
    %28 = arith.index_cast %27 : i32 to index
    %c1_10 = arith.constant 1 : index
    %29 = memref.load %arg1[%28, %c1_10] : memref<16x4xi32, #tpu.memory_space<smem>>
    %30 = arith.index_cast %29 : i32 to index
    %c0_11 = arith.constant 0 : index
    %31 = vector.load %arg2[%30, %c0_11] : memref<256x32xf32, #tpu.memory_space<vmem>>, vector<1x32xf32>
    %c1_i32_12 = arith.constant 1 : i32
    %32 = arith.addi %0, %c1_i32_12 : i32
    %33 = arith.index_cast %32 : i32 to index
    %c2_13 = arith.constant 2 : index
    %34 = memref.load %arg1[%33, %c2_13] : memref<16x4xi32, #tpu.memory_space<smem>>
    %35 = arith.index_cast %34 : i32 to index
    %c0_14 = arith.constant 0 : index
    %36 = vector.load %arg2[%35, %c0_14] : memref<256x32xf32, #tpu.memory_space<vmem>>, vector<1x32xf32>
    %c1_i32_15 = arith.constant 1 : i32
    %37 = arith.addi %0, %c1_i32_15 : i32
    %38 = arith.index_cast %37 : i32 to index
    %c3_16 = arith.constant 3 : index
    %39 = memref.load %arg1[%38, %c3_16] : memref<16x4xi32, #tpu.memory_space<smem>>
    %40 = arith.index_cast %39 : i32 to index
    %c0_17 = arith.constant 0 : index
    %41 = vector.load %arg2[%40, %c0_17] : memref<256x32xf32, #tpu.memory_space<vmem>>, vector<1x32xf32>
    %42 = tpu.concatenate %26, %31, %36, %41 in 1 : vector<1x32xf32>, vector<1x32xf32>, vector<1x32xf32>, vector<1x32xf32> -> vector<1x128xf32>
    %c2_i32 = arith.constant 2 : i32
    %43 = arith.addi %0, %c2_i32 : i32
    %44 = arith.index_cast %43 : i32 to index
    %c0_18 = arith.constant 0 : index
    %45 = memref.load %arg1[%44, %c0_18] : memref<16x4xi32, #tpu.memory_space<smem>>
    %46 = arith.index_cast %45 : i32 to index
    %c0_19 = arith.constant 0 : index
    %47 = vector.load %arg2[%46, %c0_19] : memref<256x32xf32, #tpu.memory_space<vmem>>, vector<1x32xf32>
    %c2_i32_20 = arith.constant 2 : i32
    %48 = arith.addi %0, %c2_i32_20 : i32
    %49 = arith.index_cast %48 : i32 to index
    %c1_21 = arith.constant 1 : index
    %50 = memref.load %arg1[%49, %c1_21] : memref<16x4xi32, #tpu.memory_space<smem>>
    %51 = arith.index_cast %50 : i32 to index
    %c0_22 = arith.constant 0 : index
    %52 = vector.load %arg2[%51, %c0_22] : memref<256x32xf32, #tpu.memory_space<vmem>>, vector<1x32xf32>
    %c2_i32_23 = arith.constant 2 : i32
    %53 = arith.addi %0, %c2_i32_23 : i32
    %54 = arith.index_cast %53 : i32 to index
    %c2_24 = arith.constant 2 : index
    %55 = memref.load %arg1[%54, %c2_24] : memref<16x4xi32, #tpu.memory_space<smem>>
    %56 = arith.index_cast %55 : i32 to index
    %c0_25 = arith.constant 0 : index
    %57 = vector.load %arg2[%56, %c0_25] : memref<256x32xf32, #tpu.memory_space<vmem>>, vector<1x32xf32>
    %c2_i32_26 = arith.constant 2 : i32
    %58 = arith.addi %0, %c2_i32_26 : i32
    %59 = arith.index_cast %58 : i32 to index
    %c3_27 = arith.constant 3 : index
    %60 = memref.load %arg1[%59, %c3_27] : memref<16x4xi32, #tpu.memory_space<smem>>
    %61 = arith.index_cast %60 : i32 to index
    %c0_28 = arith.constant 0 : index
    %62 = vector.load %arg2[%61, %c0_28] : memref<256x32xf32, #tpu.memory_space<vmem>>, vector<1x32xf32>
    %63 = tpu.concatenate %47, %52, %57, %62 in 1 : vector<1x32xf32>, vector<1x32xf32>, vector<1x32xf32>, vector<1x32xf32> -> vector<1x128xf32>
    %c3_i32 = arith.constant 3 : i32
    %64 = arith.addi %0, %c3_i32 : i32
    %65 = arith.index_cast %64 : i32 to index
    %c0_29 = arith.constant 0 : index
    %66 = memref.load %arg1[%65, %c0_29] : memref<16x4xi32, #tpu.memory_space<smem>>
    %67 = arith.index_cast %66 : i32 to index
    %c0_30 = arith.constant 0 : index
    %68 = vector.load %arg2[%67, %c0_30] : memref<256x32xf32, #tpu.memory_space<vmem>>, vector<1x32xf32>
    %c3_i32_31 = arith.constant 3 : i32
    %69 = arith.addi %0, %c3_i32_31 : i32
    %70 = arith.index_cast %69 : i32 to index
    %c1_32 = arith.constant 1 : index
    %71 = memref.load %arg1[%70, %c1_32] : memref<16x4xi32, #tpu.memory_space<smem>>
    %72 = arith.index_cast %71 : i32 to index
    %c0_33 = arith.constant 0 : index
    %73 = vector.load %arg2[%72, %c0_33] : memref<256x32xf32, #tpu.memory_space<vmem>>, vector<1x32xf32>
    %c3_i32_34 = arith.constant 3 : i32
    %74 = arith.addi %0, %c3_i32_34 : i32
    %75 = arith.index_cast %74 : i32 to index
    %c2_35 = arith.constant 2 : index
    %76 = memref.load %arg1[%75, %c2_35] : memref<16x4xi32, #tpu.memory_space<smem>>
    %77 = arith.index_cast %76 : i32 to index
    %c0_36 = arith.constant 0 : index
    %78 = vector.load %arg2[%77, %c0_36] : memref<256x32xf32, #tpu.memory_space<vmem>>, vector<1x32xf32>
    %c3_i32_37 = arith.constant 3 : i32
    %79 = arith.addi %0, %c3_i32_37 : i32
    %80 = arith.index_cast %79 : i32 to index
    %c3_38 = arith.constant 3 : index
    %81 = memref.load %arg1[%80, %c3_38] : memref<16x4xi32, #tpu.memory_space<smem>>
    %82 = arith.index_cast %81 : i32 to index
    %c0_39 = arith.constant 0 : index
    %83 = vector.load %arg2[%82, %c0_39] : memref<256x32xf32, #tpu.memory_space<vmem>>, vector<1x32xf32>
    %84 = tpu.concatenate %68, %73, %78, %83 in 1 : vector<1x32xf32>, vector<1x32xf32>, vector<1x32xf32>, vector<1x32xf32> -> vector<1x128xf32>
    %c4_i32 = arith.constant 4 : i32
    %85 = arith.addi %0, %c4_i32 : i32
    %86 = arith.index_cast %85 : i32 to index
    %c0_40 = arith.constant 0 : index
    %87 = memref.load %arg1[%86, %c0_40] : memref<16x4xi32, #tpu.memory_space<smem>>
    %88 = arith.index_cast %87 : i32 to index
    %c0_41 = arith.constant 0 : index
    %89 = vector.load %arg2[%88, %c0_41] : memref<256x32xf32, #tpu.memory_space<vmem>>, vector<1x32xf32>
    %c4_i32_42 = arith.constant 4 : i32
    %90 = arith.addi %0, %c4_i32_42 : i32
    %91 = arith.index_cast %90 : i32 to index
    %c1_43 = arith.constant 1 : index
    %92 = memref.load %arg1[%91, %c1_43] : memref<16x4xi32, #tpu.memory_space<smem>>
    %93 = arith.index_cast %92 : i32 to index
    %c0_44 = arith.constant 0 : index
    %94 = vector.load %arg2[%93, %c0_44] : memref<256x32xf32, #tpu.memory_space<vmem>>, vector<1x32xf32>
    %c4_i32_45 = arith.constant 4 : i32
    %95 = arith.addi %0, %c4_i32_45 : i32
    %96 = arith.index_cast %95 : i32 to index
    %c2_46 = arith.constant 2 : index
    %97 = memref.load %arg1[%96, %c2_46] : memref<16x4xi32, #tpu.memory_space<smem>>
    %98 = arith.index_cast %97 : i32 to index
    %c0_47 = arith.constant 0 : index
    %99 = vector.load %arg2[%98, %c0_47] : memref<256x32xf32, #tpu.memory_space<vmem>>, vector<1x32xf32>
    %c4_i32_48 = arith.constant 4 : i32
    %100 = arith.addi %0, %c4_i32_48 : i32
    %101 = arith.index_cast %100 : i32 to index
    %c3_49 = arith.constant 3 : index
    %102 = memref.load %arg1[%101, %c3_49] : memref<16x4xi32, #tpu.memory_space<smem>>
    %103 = arith.index_cast %102 : i32 to index
    %c0_50 = arith.constant 0 : index
    %104 = vector.load %arg2[%103, %c0_50] : memref<256x32xf32, #tpu.memory_space<vmem>>, vector<1x32xf32>
    %105 = tpu.concatenate %89, %94, %99, %104 in 1 : vector<1x32xf32>, vector<1x32xf32>, vector<1x32xf32>, vector<1x32xf32> -> vector<1x128xf32>
    %c5_i32 = arith.constant 5 : i32
    %106 = arith.addi %0, %c5_i32 : i32
    %107 = arith.index_cast %106 : i32 to index
    %c0_51 = arith.constant 0 : index
    %108 = memref.load %arg1[%107, %c0_51] : memref<16x4xi32, #tpu.memory_space<smem>>
    %109 = arith.index_cast %108 : i32 to index
    %c0_52 = arith.constant 0 : index
    %110 = vector.load %arg2[%109, %c0_52] : memref<256x32xf32, #tpu.memory_space<vmem>>, vector<1x32xf32>
    %c5_i32_53 = arith.constant 5 : i32
    %111 = arith.addi %0, %c5_i32_53 : i32
    %112 = arith.index_cast %111 : i32 to index
    %c1_54 = arith.constant 1 : index
    %113 = memref.load %arg1[%112, %c1_54] : memref<16x4xi32, #tpu.memory_space<smem>>
    %114 = arith.index_cast %113 : i32 to index
    %c0_55 = arith.constant 0 : index
    %115 = vector.load %arg2[%114, %c0_55] : memref<256x32xf32, #tpu.memory_space<vmem>>, vector<1x32xf32>
    %c5_i32_56 = arith.constant 5 : i32
    %116 = arith.addi %0, %c5_i32_56 : i32
    %117 = arith.index_cast %116 : i32 to index
    %c2_57 = arith.constant 2 : index
    %118 = memref.load %arg1[%117, %c2_57] : memref<16x4xi32, #tpu.memory_space<smem>>
    %119 = arith.index_cast %118 : i32 to index
    %c0_58 = arith.constant 0 : index
    %120 = vector.load %arg2[%119, %c0_58] : memref<256x32xf32, #tpu.memory_space<vmem>>, vector<1x32xf32>
    %c5_i32_59 = arith.constant 5 : i32
    %121 = arith.addi %0, %c5_i32_59 : i32
    %122 = arith.index_cast %121 : i32 to index
    %c3_60 = arith.constant 3 : index
    %123 = memref.load %arg1[%122, %c3_60] : memref<16x4xi32, #tpu.memory_space<smem>>
    %124 = arith.index_cast %123 : i32 to index
    %c0_61 = arith.constant 0 : index
    %125 = vector.load %arg2[%124, %c0_61] : memref<256x32xf32, #tpu.memory_space<vmem>>, vector<1x32xf32>
    %126 = tpu.concatenate %110, %115, %120, %125 in 1 : vector<1x32xf32>, vector<1x32xf32>, vector<1x32xf32>, vector<1x32xf32> -> vector<1x128xf32>
    %c6_i32 = arith.constant 6 : i32
    %127 = arith.addi %0, %c6_i32 : i32
    %128 = arith.index_cast %127 : i32 to index
    %c0_62 = arith.constant 0 : index
    %129 = memref.load %arg1[%128, %c0_62] : memref<16x4xi32, #tpu.memory_space<smem>>
    %130 = arith.index_cast %129 : i32 to index
    %c0_63 = arith.constant 0 : index
    %131 = vector.load %arg2[%130, %c0_63] : memref<256x32xf32, #tpu.memory_space<vmem>>, vector<1x32xf32>
    %c6_i32_64 = arith.constant 6 : i32
    %132 = arith.addi %0, %c6_i32_64 : i32
    %133 = arith.index_cast %132 : i32 to index
    %c1_65 = arith.constant 1 : index
    %134 = memref.load %arg1[%133, %c1_65] : memref<16x4xi32, #tpu.memory_space<smem>>
    %135 = arith.index_cast %134 : i32 to index
    %c0_66 = arith.constant 0 : index
    %136 = vector.load %arg2[%135, %c0_66] : memref<256x32xf32, #tpu.memory_space<vmem>>, vector<1x32xf32>
    %c6_i32_67 = arith.constant 6 : i32
    %137 = arith.addi %0, %c6_i32_67 : i32
    %138 = arith.index_cast %137 : i32 to index
    %c2_68 = arith.constant 2 : index
    %139 = memref.load %arg1[%138, %c2_68] : memref<16x4xi32, #tpu.memory_space<smem>>
    %140 = arith.index_cast %139 : i32 to index
    %c0_69 = arith.constant 0 : index
    %141 = vector.load %arg2[%140, %c0_69] : memref<256x32xf32, #tpu.memory_space<vmem>>, vector<1x32xf32>
    %c6_i32_70 = arith.constant 6 : i32
    %142 = arith.addi %0, %c6_i32_70 : i32
    %143 = arith.index_cast %142 : i32 to index
    %c3_71 = arith.constant 3 : index
    %144 = memref.load %arg1[%143, %c3_71] : memref<16x4xi32, #tpu.memory_space<smem>>
    %145 = arith.index_cast %144 : i32 to index
    %c0_72 = arith.constant 0 : index
    %146 = vector.load %arg2[%145, %c0_72] : memref<256x32xf32, #tpu.memory_space<vmem>>, vector<1x32xf32>
    %147 = tpu.concatenate %131, %136, %141, %146 in 1 : vector<1x32xf32>, vector<1x32xf32>, vector<1x32xf32>, vector<1x32xf32> -> vector<1x128xf32>
    %c7_i32 = arith.constant 7 : i32
    %148 = arith.addi %0, %c7_i32 : i32
    %149 = arith.index_cast %148 : i32 to index
    %c0_73 = arith.constant 0 : index
    %150 = memref.load %arg1[%149, %c0_73] : memref<16x4xi32, #tpu.memory_space<smem>>
    %151 = arith.index_cast %150 : i32 to index
    %c0_74 = arith.constant 0 : index
    %152 = vector.load %arg2[%151, %c0_74] : memref<256x32xf32, #tpu.memory_space<vmem>>, vector<1x32xf32>
    %c7_i32_75 = arith.constant 7 : i32
    %153 = arith.addi %0, %c7_i32_75 : i32
    %154 = arith.index_cast %153 : i32 to index
    %c1_76 = arith.constant 1 : index
    %155 = memref.load %arg1[%154, %c1_76] : memref<16x4xi32, #tpu.memory_space<smem>>
    %156 = arith.index_cast %155 : i32 to index
    %c0_77 = arith.constant 0 : index
    %157 = vector.load %arg2[%156, %c0_77] : memref<256x32xf32, #tpu.memory_space<vmem>>, vector<1x32xf32>
    %c7_i32_78 = arith.constant 7 : i32
    %158 = arith.addi %0, %c7_i32_78 : i32
    %159 = arith.index_cast %158 : i32 to index
    %c2_79 = arith.constant 2 : index
    %160 = memref.load %arg1[%159, %c2_79] : memref<16x4xi32, #tpu.memory_space<smem>>
    %161 = arith.index_cast %160 : i32 to index
    %c0_80 = arith.constant 0 : index
    %162 = vector.load %arg2[%161, %c0_80] : memref<256x32xf32, #tpu.memory_space<vmem>>, vector<1x32xf32>
    %c7_i32_81 = arith.constant 7 : i32
    %163 = arith.addi %0, %c7_i32_81 : i32
    %164 = arith.index_cast %163 : i32 to index
    %c3_82 = arith.constant 3 : index
    %165 = memref.load %arg1[%164, %c3_82] : memref<16x4xi32, #tpu.memory_space<smem>>
    %166 = arith.index_cast %165 : i32 to index
    %c0_83 = arith.constant 0 : index
    %167 = vector.load %arg2[%166, %c0_83] : memref<256x32xf32, #tpu.memory_space<vmem>>, vector<1x32xf32>
    %168 = tpu.concatenate %152, %157, %162, %167 in 1 : vector<1x32xf32>, vector<1x32xf32>, vector<1x32xf32>, vector<1x32xf32> -> vector<1x128xf32>
    %169 = tpu.concatenate %21, %42, %63, %84, %105, %126, %147, %168 in 0 : vector<1x128xf32>, vector<1x128xf32>, vector<1x128xf32>, vector<1x128xf32>, vector<1x128xf32>, vector<1x128xf32>, vector<1x128xf32>, vector<1x128xf32> -> vector<8x128xf32>
    %c0_84 = arith.constant 0 : index
    %c0_85 = arith.constant 0 : index
    %170 = vector.load %arg8[%c0_84, %c0_85] : memref<8x128xf32, #tpu.memory_space<vmem>>, vector<8x128xf32>
    tpu.vector_store %arg8[%c0_84, %c0_85], %169 {strides = array<i32>} : memref<8x128xf32, #tpu.memory_space<vmem>>, vector<8x128xf32>,
    %c0_86 = arith.constant 0 : index
    %c0_87 = arith.constant 0 : index
    %171 = vector.load %arg3[%c0_86, %c0_87] : memref<128x128xf32, #tpu.memory_space<vmem>>, vector<128x128xf32>
    %cst = arith.constant dense<0.000000e+00> : vector<8x128xf32>
    %172 = tpu.matmul %169, %171, %cst {dimension_numbers = #tpu.dot_dimension_numbers<[1], [0], [0], [1], [0, 0, 1, 1], [], []>} : vector<8x128xf32>, vector<128x128xf32>, vector<8x128xf32> -> vector<8x128xf32>
    %c0_88 = arith.constant 0 : index
    %c0_89 = arith.constant 0 : index
    %173 = vector.load %arg4[%c0_88, %c0_89] : memref<1x128xf32, #tpu.memory_space<vmem>>, vector<1x128xf32>
    %174 = vector.broadcast %173 : vector<1x128xf32> to vector<8x128xf32>
    %175 = arith.addf %172, %174 : vector<8x128xf32>
    %cst_90 = arith.constant 0.000000e+00 : f32
    %176 = vector.broadcast %cst_90 : f32 to vector<8x128xf32>
    %177 = arith.maximumf %175, %176 : vector<8x128xf32>
    %c0_91 = arith.constant 0 : index
    %c0_92 = arith.constant 0 : index
    %178 = vector.load %arg5[%c0_91, %c0_92] : memref<128x256xf32, #tpu.memory_space<vmem>>, vector<128x256xf32>
    %cst_93 = arith.constant dense<0.000000e+00> : vector<8x256xf32>
    %179 = tpu.matmul %177, %178, %cst_93 {dimension_numbers = #tpu.dot_dimension_numbers<[1], [0], [0], [1], [0, 0, 1, 1], [], []>} : vector<8x128xf32>, vector<128x256xf32>, vector<8x256xf32> -> vector<8x256xf32>
    %c0_94 = arith.constant 0 : index
    %c0_95 = arith.constant 0 : index
    %180 = vector.load %arg6[%c0_94, %c0_95] : memref<1x256xf32, #tpu.memory_space<vmem>>, vector<1x256xf32>
    %181 = vector.broadcast %180 : vector<1x256xf32> to vector<8x256xf32>
    %182 = arith.addf %179, %181 : vector<8x256xf32>
    %cst_96 = arith.constant dense<0xFF800000> : vector<8xf32>
    %183 = vector.multi_reduction <maximumf>, %182, %cst_96 [1] : vector<8x256xf32> to vector<8xf32>
    %184 = vector.shape_cast %183 : vector<8xf32> to vector<8x1xf32>
    %185 = vector.broadcast %184 : vector<8x1xf32> to vector<8x256xf32>
    %186 = arith.subf %182, %185 : vector<8x256xf32>
    %187 = math.exp %186 : vector<8x256xf32>
    %cst_97 = arith.constant dense<0.000000e+00> : vector<8xf32>
    %188 = vector.multi_reduction <add>, %187, %cst_97 [1] : vector<8x256xf32> to vector<8xf32>
    %189 = vector.shape_cast %188 : vector<8xf32> to vector<8x1xf32>
    %190 = math.log %189 : vector<8x1xf32>
    %191 = arith.addf %190, %184 : vector<8x1xf32>
    %192 = vector.broadcast %191 : vector<8x1xf32> to vector<8x256xf32>
    %193 = arith.subf %182, %192 : vector<8x256xf32>
    %c0_98 = arith.constant 0 : index
    %c0_99 = arith.constant 0 : index
    %194 = vector.load %arg7[%c0_98, %c0_99] : memref<8x256xf32, #tpu.memory_space<vmem>>, vector<8x256xf32>
    tpu.vector_store %arg7[%c0_98, %c0_99], %193 {strides = array<i32>} : memref<8x256xf32, #tpu.memory_space<vmem>>, vector<8x256xf32>,
    return
  }
  func.func @transform_0(%arg0: i32, %arg1: memref<16x4xi32, #tpu.memory_space<smem>>) -> (i32, i32) {
    %c0_i32 = arith.constant 0 : i32
    %c0_i32_0 = arith.constant 0 : i32
    %c0_i32_1 = arith.constant 0 : i32
    return %c0_i32, %c0_i32_0 : i32, i32
  }
  func.func @transform_1(%arg0: i32, %arg1: memref<16x4xi32, #tpu.memory_space<smem>>) -> (i32, i32) {
    %c0_i32 = arith.constant 0 : i32
    %c0_i32_0 = arith.constant 0 : i32
    %c0_i32_1 = arith.constant 0 : i32
    return %c0_i32, %c0_i32_0 : i32, i32
  }
  func.func @transform_2(%arg0: i32, %arg1: memref<16x4xi32, #tpu.memory_space<smem>>) -> (i32, i32) {
    %c0_i32 = arith.constant 0 : i32
    %c0_i32_0 = arith.constant 0 : i32
    %c0_i32_1 = arith.constant 0 : i32
    return %c0_i32, %c0_i32_0 : i32, i32
  }
  func.func @transform_3(%arg0: i32, %arg1: memref<16x4xi32, #tpu.memory_space<smem>>) -> (i32, i32) {
    %c0_i32 = arith.constant 0 : i32
    %c0_i32_0 = arith.constant 0 : i32
    %c0_i32_1 = arith.constant 0 : i32
    return %c0_i32, %c0_i32_0 : i32, i32
  }
  func.func @transform_4(%arg0: i32, %arg1: memref<16x4xi32, #tpu.memory_space<smem>>) -> (i32, i32) {
    %c0_i32 = arith.constant 0 : i32
    %c0_i32_0 = arith.constant 0 : i32
    %c0_i32_1 = arith.constant 0 : i32
    return %c0_i32, %c0_i32_0 : i32, i32
  }
  func.func @transform_5(%arg0: i32, %arg1: memref<16x4xi32, #tpu.memory_space<smem>>) -> (i32, i32) {
    %c0_i32 = arith.constant 0 : i32
    %c0_i32_0 = arith.constant 0 : i32
    return %arg0, %c0_i32 : i32, i32
  }
  func.func @transform_6(%arg0: i32, %arg1: memref<16x4xi32, #tpu.memory_space<smem>>) -> (i32, i32) {
    %c0_i32 = arith.constant 0 : i32
    %c0_i32_0 = arith.constant 0 : i32
    return %arg0, %c0_i32 : i32, i32
  }
}

</mosaic_0001>

<llo_original>
// kernel: tpu_custom_call.1
$region0: #{tpu_custom_call.1}
  #allocation0 [shape = 'u32[]', space=smem, size = 0x4, offset = 0x4, fixed_abs, tag = 'smem constant byte address 0x4 - core index']
  #allocation1 [shape = 'u32[144,128]{1,0:T(1,128)}', space=vmem, size = 0x12000, scoped, tag = 'internal scratch']
  #allocation2 [shape = 's32[1]{0}', space=sflag, size = 0x4, scoped, tag = 'scoped memory for tpu_custom_call.1']
  #allocation3 [shape = 'u8[8192]{0}', space=smem, size = 0x2000, scoped, tag = 'prefetched SMEM operand 0']
  %s0 = inlined_call_operand.vmem [shape: s32[16,4], index: 0, kind: input, shape index: {}]
  %s1 = inlined_call_operand.vmem [shape: f32[256,32], index: 1, kind: input, shape index: {}]
  %s2 = inlined_call_operand.hbm [shape: f32[128,128], index: 2, kind: input, shape index: {}]
  %s3 = inlined_call_operand.vmem [shape: f32[1,128], index: 3, kind: input, shape index: {}]
  %s4 = inlined_call_operand.vmem [shape: f32[128,256], index: 4, kind: input, shape index: {}]
  %s5 = inlined_call_operand.vmem [shape: f32[1,256], index: 5, kind: input, shape index: {}]
  %s6 = inlined_call_operand.hbm [shape: f32[16,256], index: 6, kind: output, shape index: {0}]
  %s7 = inlined_call_operand.hbm [shape: f32[16,128], index: 7, kind: output, shape index: {1}]
  %8 = xla_tuple %s6, %s7
  %s9 = sld [smem:[#allocation0]]
  $region65: #{tpu_custom_call.1} parent=0
    _
  %s11 = ssub.s32 1, %s9
  %s12 = scalar_select 0, %s11, %s9
  %s13 = sshll.u32 %s0, 4
  %s14 = int_to_ptr.vmem [resolvable:$true] %s13
  %16 = dma.vmem_to_smem %s14, 256, [#allocation3], [#allocation2]
  %17 = dma.done [#allocation2], 256
  %18 = sfence
  $region1: #{tpu_custom_call.1} parent=0
    #allocation4 [shape = 'u8[65536]{0}', space=vmem, size = 0x10000, scoped, tag = 'input window, operand 2, single buffered']
    #allocation5 [shape = 's32[2]{0}', space=sflag, size = 0x8, scoped, tag = 'scoped memory for tpu_custom_call.1']
    #allocation6 [shape = 's32[2]{0}', space=sflag, size = 0x8, scoped, tag = 'scoped memory for tpu_custom_call.1']
    #allocation7 [shape = 'u8[16384]{0}', space=vmem, size = 0x4000, scoped, tag = 'output window, operand 0']
    #allocation8 [shape = 'u8[8192]{0}', space=vmem, size = 0x2000, scoped, tag = 'output window, operand 1']
    #allocation9 [shape = 's32[2]{0}', space=sflag, size = 0x8, scoped, tag = 'scoped memory for tpu_custom_call.1']
    %19 = vsyncpa [#allocation5], 0
    %20 = vsyncpa [#allocation6], 0
    %s21 = scalar_lea.sflag [#allocation6], 1
    %22 = vsyncpa %s21, 0
    %23 = vsyncpa [#allocation9], 0
    %s24 = scalar_lea.sflag [#allocation9], 1
    %25 = vsyncpa %s24, 0
    loop: start=0, step=1, limit=4
    $region2: #{tpu_custom_call.1} parent=1 // loop_pre_header
      _
    $region3: #{tpu_custom_call.1} parent=1 // loop_header
      %s27 = sphi 0, %s31
      %p28 = scmp.ge.s32.totalorder %s27, 4
      %s35 = sphi 0, %s35
      %s37 = sphi 0, %s35
      %s38 = sphi 0, %s37
      %s52 = sphi 0, %s38
      %s56 = sphi 0, %s56
      %s58 = sphi 0, %s56
      %s59 = sphi 0, %s58
      %s73 = sphi 0, %s59
      %s77 = sphi 0, %s77
      %s79 = sphi 0, %s77
      %s80 = sphi 0, %s79
      %s94 = sphi 0, %s80
      %s98 = sphi 0, %s98
      %s100 = sphi 0, %s98
      %s101 = sphi 0, %s100
      %s115 = sphi 0, %s101
      %s119 = sphi 0, %s119
      %s121 = sphi 0, %s119
      %s122 = sphi 0, %s121
      %s136 = sphi 0, %s122
      %s142 = sphi 0, %s144
      %s145 = sphi 0, %s142
      %s146 = sphi 0, %s145
      %s162 = sphi 0, %s146
      %s168 = sphi 0, %s170
      %s171 = sphi 0, %s168
      %s172 = sphi 0, %s171
      %s188 = sphi 0, %s172
    $region4: #{tpu_custom_call.1} parent=1 // loop_header_branch
      %30 = sbr.rel (%p28) target = $region8
    $region5: #{tpu_custom_call.1} parent=1 // loop_body
      %s32 = ssub.s32 %s27, 1
      %s33 = ssub.s32 %s27, 2
      %s34 = sadd.s32 %s27, 1
      %s36 = sadd.s32 %s35, 1
      %p39 = scmp.eq.s32.totalorder %s27, 1
      %p40 = scmp.ne.s32.totalorder %s35, %s37
      %p41 = scmp.eq.s32.totalorder %s27, 0
      %p42 = por %p40, %p41
      %p43 = scmp.ne.s32.totalorder %s35, %s37
      %p44 = scmp.eq.s32.totalorder %s32, 1
      %p45 = por %p43, %p44
      %p46 = scmp.ne.s32.totalorder %s37, %s38
      %p47 = scmp.eq.s32.totalorder %s32, 0
      %p48 = por %p46, %p47
      %p49 = scmp.ne.s32.totalorder %s37, %s38
      %p50 = scmp.eq.s32.totalorder %s33, 1
      %p51 = por %p49, %p50
      %p53 = scmp.ne.s32.totalorder %s38, %s52
      %p54 = scmp.eq.s32.totalorder %s33, 0
      %p55 = por %p53, %p54
      %s57 = sadd.s32 %s56, 1
      %p60 = scmp.eq.s32.totalorder %s27, 1
      %p61 = scmp.ne.s32.totalorder %s56, %s58
      %p62 = scmp.eq.s32.totalorder %s27, 0
      %p63 = por %p61, %p62
      %p64 = scmp.ne.s32.totalorder %s56, %s58
      %p65 = scmp.eq.s32.totalorder %s32, 1
      %p66 = por %p64, %p65
      %p67 = scmp.ne.s32.totalorder %s58, %s59
      %p68 = scmp.eq.s32.totalorder %s32, 0
      %p69 = por %p67, %p68
      %p70 = scmp.ne.s32.totalorder %s58, %s59
      %p71 = scmp.eq.s32.totalorder %s33, 1
      %p72 = por %p70, %p71
      %p74 = scmp.ne.s32.totalorder %s59, %s73
      %p75 = scmp.eq.s32.totalorder %s33, 0
      %p76 = por %p74, %p75
      %s78 = sadd.s32 %s77, 1
      %p81 = scmp.eq.s32.totalorder %s27, 1
      %p82 = scmp.ne.s32.totalorder %s77, %s79
      %p83 = scmp.eq.s32.totalorder %s27, 0
      %p84 = por %p82, %p83
      %p85 = scmp.ne.s32.totalorder %s77, %s79
      %p86 = scmp.eq.s32.totalorder %s32, 1
      %p87 = por %p85, %p86
      %p88 = scmp.ne.s32.totalorder %s79, %s80
      %p89 = scmp.eq.s32.totalorder %s32, 0
      %p90 = por %p88, %p89
      %p91 = scmp.ne.s32.totalorder %s79, %s80
      %p92 = scmp.eq.s32.totalorder %s33, 1
      %p93 = por %p91, %p92
      %p95 = scmp.ne.s32.totalorder %s80, %s94
      %p96 = scmp.eq.s32.totalorder %s33, 0
      %p97 = por %p95, %p96
      %s99 = sadd.s32 %s98, 1
      %p102 = scmp.eq.s32.totalorder %s27, 1
      %p103 = scmp.ne.s32.totalorder %s98, %s100
      %p104 = scmp.eq.s32.totalorder %s27, 0
      %p105 = por %p103, %p104
      %p106 = scmp.ne.s32.totalorder %s98, %s100
      %p107 = scmp.eq.s32.totalorder %s32, 1
      %p108 = por %p106, %p107
      %p109 = scmp.ne.s32.totalorder %s100, %s101
      %p110 = scmp.eq.s32.totalorder %s32, 0
      %p111 = por %p109, %p110
      %p112 = scmp.ne.s32.totalorder %s100, %s101
      %p113 = scmp.eq.s32.totalorder %s33, 1
      %p114 = por %p112, %p113
      %p116 = scmp.ne.s32.totalorder %s101, %s115
      %p117 = scmp.eq.s32.totalorder %s33, 0
      %p118 = por %p116, %p117
      %s120 = sadd.s32 %s119, 1
      %p123 = scmp.eq.s32.totalorder %s27, 1
      %p124 = scmp.ne.s32.totalorder %s119, %s121
      %p125 = scmp.eq.s32.totalorder %s27, 0
      %p126 = por %p124, %p125
      %p127 = scmp.ne.s32.totalorder %s119, %s121
      %p128 = scmp.eq.s32.totalorder %s32, 1
      %p129 = por %p127, %p128
      %p130 = scmp.ne.s32.totalorder %s121, %s122
      %p131 = scmp.eq.s32.totalorder %s32, 0
      %p132 = por %p130, %p131
      %p133 = scmp.ne.s32.totalorder %s121, %s122
      %p134 = scmp.eq.s32.totalorder %s33, 1
      %p135 = por %p133, %p134
      %p137 = scmp.ne.s32.totalorder %s122, %s136
      %p138 = scmp.eq.s32.totalorder %s33, 0
      %p139 = por %p137, %p138
      %s140 = ssub.s32 %s27, %s34
      %p141 = scmp.eq.s32.totalorder %s140, 0
      %s143 = sadd.s32 %s142, 1
      %s144 = scalar_select %p141, %s142, %s143
      %p147 = pneg %p141
      %p148 = scmp.eq.s32.totalorder %s27, 1
      %p149 = por %p147, %p148
      %p150 = scmp.ne.s32.totalorder %s142, %s145
      %p151 = scmp.eq.s32.totalorder %s27, 0
      %p152 = por %p150, %p151
      %p153 = scmp.ne.s32.totalorder %s142, %s145
      %p154 = scmp.eq.s32.totalorder %s32, 1
      %p155 = por %p153, %p154
      %p156 = scmp.ne.s32.totalorder %s145, %s146
      %p157 = scmp.eq.s32.totalorder %s32, 0
      %p158 = por %p156, %p157
      %p159 = scmp.ne.s32.totalorder %s145, %s146
      %p160 = scmp.eq.s32.totalorder %s33, 1
      %p161 = por %p159, %p160
      %p163 = scmp.ne.s32.totalorder %s146, %s162
      %p164 = scmp.eq.s32.totalorder %s33, 0
      %p165 = por %p163, %p164
      %s166 = ssub.s32 %s27, %s34
      %p167 = scmp.eq.s32.totalorder %s166, 0
      %s169 = sadd.s32 %s168, 1
      %s170 = scalar_select %p167, %s168, %s169
      %p173 = pneg %p167
      %p174 = scmp.eq.s32.totalorder %s27, 1
      %p175 = por %p173, %p174
      %p176 = scmp.ne.s32.totalorder %s168, %s171
      %p177 = scmp.eq.s32.totalorder %s27, 0
      %p178 = por %p176, %p177
      %p179 = scmp.ne.s32.totalorder %s168, %s171
      %p180 = scmp.eq.s32.totalorder %s32, 1
      %p181 = por %p179, %p180
      %p182 = scmp.ne.s32.totalorder %s171, %s172
      %p183 = scmp.eq.s32.totalorder %s32, 0
      %p184 = por %p182, %p183
      %p185 = scmp.ne.s32.totalorder %s171, %s172
      %p186 = scmp.eq.s32.totalorder %s33, 1
      %p187 = por %p185, %p186
      %p189 = scmp.ne.s32.totalorder %s172, %s188
      %p190 = scmp.eq.s32.totalorder %s33, 0
      %p191 = por %p189, %p190
      %p192 = scmp.le.s32.totalorder 1, %s27
      %p193 = scmp.lt.s32.totalorder %s27, 3
      %p194 = pnand %p192, %p193
      %p195 = pneg %p194
      // Predicated region
      $region9: #{tpu_custom_call.1} parent=5 // pred_check
        _
      $region10: #{tpu_custom_call.1} parent=5 // pred_check_branch
        %197 = sbr.rel (%p194) target = $region12
      $region11: #{tpu_custom_call.1} parent=5 // pred_region
        %s198 = ssub.s32 %s27, 1
        // Predicated region
        $region13: #{tpu_custom_call.1} parent=11 // pred_check
          %p199 = pneg %p48
        $region14: #{tpu_custom_call.1} parent=11 // pred_check_branch
          %201 = sbr.rel (%p199) target = $region16
        $region15: #{tpu_custom_call.1} parent=11 // pred_region
          _
        $region16: #{tpu_custom_call.1} parent=11 // pred_fallthru
          _
        // Predicated region
        $region17: #{tpu_custom_call.1} parent=11 // pred_check
          %p202 = pneg %p69
        $region18: #{tpu_custom_call.1} parent=11 // pred_check_branch
          %204 = sbr.rel (%p202) target = $region20
        $region19: #{tpu_custom_call.1} parent=11 // pred_region
          %s206 = ssub.s32 2048, 2048
          %207 = vsyncadd [#allocation5], %s206
          %s208 = sshll.u32 [#allocation4], 4
          %s209 = int_to_ptr.vmem [resolvable:$true] %s208
          %214 = dma.hbm_to_vmem [thread:$0]  %s2, 2048, %s209, [#allocation5], 128, 128, 8
        $region20: #{tpu_custom_call.1} parent=11 // pred_fallthru
          _
        // Predicated region
        $region21: #{tpu_custom_call.1} parent=11 // pred_check
          %p215 = pneg %p90
        $region22: #{tpu_custom_call.1} parent=11 // pred_check_branch
          %217 = sbr.rel (%p215) target = $region24
        $region23: #{tpu_custom_call.1} parent=11 // pred_region
          _
        $region24: #{tpu_custom_call.1} parent=11 // pred_fallthru
          _
        // Predicated region
        $region25: #{tpu_custom_call.1} parent=11 // pred_check
          %p218 = pneg %p111
        $region26: #{tpu_custom_call.1} parent=11 // pred_check_branch
          %220 = sbr.rel (%p218) target = $region28
        $region27: #{tpu_custom_call.1} parent=11 // pred_region
          _
        $region28: #{tpu_custom_call.1} parent=11 // pred_fallthru
          _
        // Predicated region
        $region29: #{tpu_custom_call.1} parent=11 // pred_check
          %p221 = pneg %p132
        $region30: #{tpu_custom_call.1} parent=11 // pred_check_branch
          %223 = sbr.rel (%p221) target = $region32
        $region31: #{tpu_custom_call.1} parent=11 // pred_region
          _
        $region32: #{tpu_custom_call.1} parent=11 // pred_fallthru
          _
      $region12: #{tpu_custom_call.1} parent=5 // pred_fallthru
        _
      %p224 = scmp.lt.s32.totalorder %s27, 2
      // Predicated region
      $region33: #{tpu_custom_call.1} parent=5 // pred_check
        %p225 = pneg %p224
      $region34: #{tpu_custom_call.1} parent=5 // pred_check_branch
        %227 = sbr.rel (%p225) target = $region36
      $region35: #{tpu_custom_call.1} parent=5 // pred_region
        _
      $region36: #{tpu_custom_call.1} parent=5 // pred_fallthru
        _
      %p228 = scmp.le.s32.totalorder 1, %s27
      %p229 = scmp.lt.s32.totalorder %s27, 3
      %p230 = pnand %p228, %p229
      %p231 = pneg %p230
      // Predicated region
      $region37: #{tpu_custom_call.1} parent=5 // pred_check
        _
      $region38: #{tpu_custom_call.1} parent=5 // pred_check_branch
        %233 = sbr.rel (%p230) target = $region40
      $region39: #{tpu_custom_call.1} parent=5 // pred_region
        %s234 = ssub.s32 %s27, 1
        // Predicated region
        $region41: #{tpu_custom_call.1} parent=39 // pred_check
          %p235 = pneg %p69
        $region42: #{tpu_custom_call.1} parent=39 // pred_check_branch
          %237 = sbr.rel (%p235) target = $region44
        $region43: #{tpu_custom_call.1} parent=39 // pred_region
          %238 = dma.done [#allocation5], 2048
        $region44: #{tpu_custom_call.1} parent=39 // pred_fallthru
          _
        %p239 = pneg %p48
        %p240 = pneg %p45
        %p241 = pneg %p69
        %p242 = pneg %p66
        %p243 = pneg %p90
        %p244 = pneg %p87
        %p245 = pneg %p111
        %p246 = pneg %p108
        %p247 = pneg %p132
        %p248 = pneg %p129
        %p249 = pneg %p158
        %p250 = pneg %p155
        %s251 = sand.u32 %s145, 1
        %s252 = scalar_lea.sflag [#allocation6], %s251
        %s253 = sand.u32 %s145, 1
        %s254 = smul.addr %s253, 16
        %s255 = scalar_lea.vmem [#allocation7], %s254
        %p256 = pneg %p184
        %p257 = pneg %p181
        %s258 = sand.u32 %s171, 1
        %s259 = scalar_lea.sflag [#allocation9], %s258
        %s260 = sand.u32 %s171, 1
        %s261 = smul.addr %s260, 8
        %s262 = scalar_lea.vmem [#allocation8], %s261
        %s263 = smul.u32 %s32, 8
        %s264 = smul.u32 %s263, 128
        %s265 = sld [smem:[#allocation3 + %s264]]
        %s266 = scalar_lea.vmem %s1, %s265
        %v267 = vld [vmem:[%s266] sm:$0x1]
        %s268 = sadd.s32 %s264, 1
        %s269 = sld [smem:[#allocation3 + %s268]]
        %s270 = scalar_lea.vmem %s1, %s269
        %v271 = vld [vmem:[%s270] sm:$0x1]
        %s272 = sadd.s32 %s264, 2
        %s273 = sld [smem:[#allocation3 + %s272]]
        %s274 = scalar_lea.vmem %s1, %s273
        %v275 = vld [vmem:[%s274] sm:$0x1]
        %s276 = sadd.s32 %s264, 3
        %s277 = sld [smem:[#allocation3 + %s276]]
        %s278 = scalar_lea.vmem %s1, %s277
        %v279 = vld [vmem:[%s278] sm:$0x1]
        %281 = vrot.lane.b32.xlu0 %v271, 32
        %v282 = vpop.permute.xlu0 %281
        %285 = vrot.lane.b32.xlu0 %v275, 64
        %v286 = vpop.permute.xlu0 %285
        %289 = vrot.lane.b32.xlu0 %v279, 96
        %v290 = vpop.permute.xlu0 %289
        %vm292 = vcmask 261120
        %v293 = vsel %vm292, %v267, %v282
        %vm294 = vcmask 523264
        %v295 = vsel %vm294, %v293, %v286
        %vm296 = vcmask 785408
        %v297 = vsel %vm296, %v295, %v290
        %s298 = sadd.s32 %s263, 1
        %s299 = smul.u32 %s298, 128
        %s300 = sld [smem:[#allocation3 + %s299]]
        %s301 = scalar_lea.vmem %s1, %s300
        %v302 = vld [vmem:[%s301] sm:$0x1]
        %s303 = sadd.s32 %s299, 1
        %s304 = sld [smem:[#allocation3 + %s303]]
        %s305 = scalar_lea.vmem %s1, %s304
        %v306 = vld [vmem:[%s305] sm:$0x1]
        %s307 = sadd.s32 %s299, 2
        %s308 = sld [smem:[#allocation3 + %s307]]
        %s309 = scalar_lea.vmem %s1, %s308
        %v310 = vld [vmem:[%s309] sm:$0x1]
        %s311 = sadd.s32 %s299, 3
        %s312 = sld [smem:[#allocation3 + %s311]]
        %s313 = scalar_lea.vmem %s1, %s312
        %v314 = vld [vmem:[%s313] sm:$0x1]
        %316 = vrot.lane.b32.xlu0 %v306, 32
        %v317 = vpop.permute.xlu0 %316
        %320 = vrot.lane.b32.xlu0 %v310, 64
        %v321 = vpop.permute.xlu0 %320
        %324 = vrot.lane.b32.xlu0 %v314, 96
        %v325 = vpop.permute.xlu0 %324
        %v327 = vsel %vm292, %v302, %v317
        %v328 = vsel %vm294, %v327, %v321
        %v329 = vsel %vm296, %v328, %v325
        %s330 = sadd.s32 %s263, 2
        %s331 = smul.u32 %s330, 128
        %s332 = sld [smem:[#allocation3 + %s331]]
        %s333 = scalar_lea.vmem %s1, %s332
        %v334 = vld [vmem:[%s333] sm:$0x1]
        %s335 = sadd.s32 %s331, 1
        %s336 = sld [smem:[#allocation3 + %s335]]
        %s337 = scalar_lea.vmem %s1, %s336
        %v338 = vld [vmem:[%s337] sm:$0x1]
        %s339 = sadd.s32 %s331, 2
        %s340 = sld [smem:[#allocation3 + %s339]]
        %s341 = scalar_lea.vmem %s1, %s340
        %v342 = vld [vmem:[%s341] sm:$0x1]
        %s343 = sadd.s32 %s331, 3
        %s344 = sld [smem:[#allocation3 + %s343]]
        %s345 = scalar_lea.vmem %s1, %s344
        %v346 = vld [vmem:[%s345] sm:$0x1]
        %348 = vrot.lane.b32.xlu0 %v338, 32
        %v349 = vpop.permute.xlu0 %348
        %352 = vrot.lane.b32.xlu0 %v342, 64
        %v353 = vpop.permute.xlu0 %352
        %356 = vrot.lane.b32.xlu0 %v346, 96
        %v357 = vpop.permute.xlu0 %356
        %v359 = vsel %vm292, %v334, %v349
        %v360 = vsel %vm294, %v359, %v353
        %v361 = vsel %vm296, %v360, %v357
        %s362 = sadd.s32 %s263, 3
        %s363 = smul.u32 %s362, 128
        %s364 = sld [smem:[#allocation3 + %s363]]
        %s365 = scalar_lea.vmem %s1, %s364
        %v366 = vld [vmem:[%s365] sm:$0x1]
        %s367 = sadd.s32 %s363, 1
        %s368 = sld [smem:[#allocation3 + %s367]]
        %s369 = scalar_lea.vmem %s1, %s368
        %v370 = vld [vmem:[%s369] sm:$0x1]
        %s371 = sadd.s32 %s363, 2
        %s372 = sld [smem:[#allocation3 + %s371]]
        %s373 = scalar_lea.vmem %s1, %s372
        %v374 = vld [vmem:[%s373] sm:$0x1]
        %s375 = sadd.s32 %s363, 3
        %s376 = sld [smem:[#allocation3 + %s375]]
        %s377 = scalar_lea.vmem %s1, %s376
        %v378 = vld [vmem:[%s377] sm:$0x1]
        %380 = vrot.lane.b32.xlu0 %v370, 32
        %v381 = vpop.permute.xlu0 %380
        %384 = vrot.lane.b32.xlu0 %v374, 64
        %v385 = vpop.permute.xlu0 %384
        %388 = vrot.lane.b32.xlu0 %v378, 96
        %v389 = vpop.permute.xlu0 %388
        %v391 = vsel %vm292, %v366, %v381
        %v392 = vsel %vm294, %v391, %v385
        %v393 = vsel %vm296, %v392, %v389
        %s394 = sadd.s32 %s263, 4
        %s395 = smul.u32 %s394, 128
        %s396 = sld [smem:[#allocation3 + %s395]]
        %s397 = scalar_lea.vmem %s1, %s396
        %v398 = vld [vmem:[%s397] sm:$0x1]
        %s399 = sadd.s32 %s395, 1
        %s400 = sld [smem:[#allocation3 + %s399]]
        %s401 = scalar_lea.vmem %s1, %s400
        %v402 = vld [vmem:[%s401] sm:$0x1]
        %s403 = sadd.s32 %s395, 2
        %s404 = sld [smem:[#allocation3 + %s403]]
        %s405 = scalar_lea.vmem %s1, %s404
        %v406 = vld [vmem:[%s405] sm:$0x1]
        %s407 = sadd.s32 %s395, 3
        %s408 = sld [smem:[#allocation3 + %s407]]
        %s409 = scalar_lea.vmem %s1, %s408
        %v410 = vld [vmem:[%s409] sm:$0x1]
        %412 = vrot.lane.b32.xlu0 %v402, 32
        %v413 = vpop.permute.xlu0 %412
        %416 = vrot.lane.b32.xlu0 %v406, 64
        %v417 = vpop.permute.xlu0 %416
        %420 = vrot.lane.b32.xlu0 %v410, 96
        %v421 = vpop.permute.xlu0 %420
        %v423 = vsel %vm292, %v398, %v413
        %v424 = vsel %vm294, %v423, %v417
        %v425 = vsel %vm296, %v424, %v421
        %s426 = sadd.s32 %s263, 5
        %s427 = smul.u32 %s426, 128
        %s428 = sld [smem:[#allocation3 + %s427]]
        %s429 = scalar_lea.vmem %s1, %s428
        %v430 = vld [vmem:[%s429] sm:$0x1]
        %s431 = sadd.s32 %s427, 1
        %s432 = sld [smem:[#allocation3 + %s431]]
        %s433 = scalar_lea.vmem %s1, %s432
        %v434 = vld [vmem:[%s433] sm:$0x1]
        %s435 = sadd.s32 %s427, 2
        %s436 = sld [smem:[#allocation3 + %s435]]
        %s437 = scalar_lea.vmem %s1, %s436
        %v438 = vld [vmem:[%s437] sm:$0x1]
        %s439 = sadd.s32 %s427, 3
        %s440 = sld [smem:[#allocation3 + %s439]]
        %s441 = scalar_lea.vmem %s1, %s440
        %v442 = vld [vmem:[%s441] sm:$0x1]
        %444 = vrot.lane.b32.xlu0 %v434, 32
        %v445 = vpop.permute.xlu0 %444
        %448 = vrot.lane.b32.xlu0 %v438, 64
        %v449 = vpop.permute.xlu0 %448
        %452 = vrot.lane.b32.xlu0 %v442, 96
        %v453 = vpop.permute.xlu0 %452
        %v455 = vsel %vm292, %v430, %v445
        %v456 = vsel %vm294, %v455, %v449
        %v457 = vsel %vm296, %v456, %v453
        %s458 = sadd.s32 %s263, 6
        %s459 = smul.u32 %s458, 128
        %s460 = sld [smem:[#allocation3 + %s459]]
        %s461 = scalar_lea.vmem %s1, %s460
        %v462 = vld [vmem:[%s461] sm:$0x1]
        %s463 = sadd.s32 %s459, 1
        %s464 = sld [smem:[#allocation3 + %s463]]
        %s465 = scalar_lea.vmem %s1, %s464
        %v466 = vld [vmem:[%s465] sm:$0x1]
        %s467 = sadd.s32 %s459, 2
        %s468 = sld [smem:[#allocation3 + %s467]]
        %s469 = scalar_lea.vmem %s1, %s468
        %v470 = vld [vmem:[%s469] sm:$0x1]
        %s471 = sadd.s32 %s459, 3
        %s472 = sld [smem:[#allocation3 + %s471]]
        %s473 = scalar_lea.vmem %s1, %s472
        %v474 = vld [vmem:[%s473] sm:$0x1]
        %476 = vrot.lane.b32.xlu0 %v466, 32
        %v477 = vpop.permute.xlu0 %476
        %480 = vrot.lane.b32.xlu0 %v470, 64
        %v481 = vpop.permute.xlu0 %480
        %484 = vrot.lane.b32.xlu0 %v474, 96
        %v485 = vpop.permute.xlu0 %484
        %v487 = vsel %vm292, %v462, %v477
        %v488 = vsel %vm294, %v487, %v481
        %v489 = vsel %vm296, %v488, %v485
        %s490 = sadd.s32 %s263, 7
        %s491 = smul.u32 %s490, 128
        %s492 = sld [smem:[#allocation3 + %s491]]
        %s493 = scalar_lea.vmem %s1, %s492
        %v494 = vld [vmem:[%s493] sm:$0x1]
        %s495 = sadd.s32 %s491, 1
        %s496 = sld [smem:[#allocation3 + %s495]]
        %s497 = scalar_lea.vmem %s1, %s496
        %v498 = vld [vmem:[%s497] sm:$0x1]
        %s499 = sadd.s32 %s491, 2
        %s500 = sld [smem:[#allocation3 + %s499]]
        %s501 = scalar_lea.vmem %s1, %s500
        %v502 = vld [vmem:[%s501] sm:$0x1]
        %s503 = sadd.s32 %s491, 3
        %s504 = sld [smem:[#allocation3 + %s503]]
        %s505 = scalar_lea.vmem %s1, %s504
        %v506 = vld [vmem:[%s505] sm:$0x1]
        %508 = vrot.lane.b32.xlu0 %v498, 32
        %v509 = vpop.permute.xlu0 %508
        %512 = vrot.lane.b32.xlu0 %v502, 64
        %v513 = vpop.permute.xlu0 %512
        %516 = vrot.lane.b32.xlu0 %v506, 96
        %v517 = vpop.permute.xlu0 %516
        %v519 = vsel %vm292, %v494, %v509
        %v520 = vsel %vm294, %v519, %v513
        %v521 = vsel %vm296, %v520, %v517
        %v523 = vrot.slane %v329, 7
        %v526 = vrot.slane %v361, 6
        %v529 = vrot.slane %v393, 5
        %v532 = vrot.slane %v425, 4
        %v535 = vrot.slane %v457, 3
        %v538 = vrot.slane %v489, 2
        %v541 = vrot.slane %v521, 1
        %vm543 = vcmask 1040384
        %v544 = vsel %vm543, %v297, %v523
        %vm545 = vcmask 1041408
        %v546 = vsel %vm545, %v544, %v526
        %vm547 = vcmask 1042432
        %v548 = vsel %vm547, %v546, %v529
        %vm549 = vcmask 1043456
        %v550 = vsel %vm549, %v548, %v532
        %vm551 = vcmask 1044480
        %v552 = vsel %vm551, %v550, %v535
        %vm553 = vcmask 1045504
        %v554 = vsel %vm553, %v552, %v538
        %vm555 = vcmask 1046528
        %v556 = vsel %vm555, %v554, %v541
        %557 = vst [vmem:[%s262] sm:$0xff] %v556
        %v558 = vld [vmem:[#allocation4] sm:$0xff]
        %v559 = vld [vmem:[#allocation4 + $0x8] sm:$0xff]
        %v560 = vld [vmem:[#allocation4 + $0x10] sm:$0xff]
        %v561 = vld [vmem:[#allocation4 + $0x18] sm:$0xff]
        %v562 = vld [vmem:[#allocation4 + $0x20] sm:$0xff]
        %v563 = vld [vmem:[#allocation4 + $0x28] sm:$0xff]
        %v564 = vld [vmem:[#allocation4 + $0x30] sm:$0xff]
        %v565 = vld [vmem:[#allocation4 + $0x38] sm:$0xff]
        %v566 = vld [vmem:[#allocation4 + $0x40] sm:$0xff]
        %v567 = vld [vmem:[#allocation4 + $0x48] sm:$0xff]
        %v568 = vld [vmem:[#allocation4 + $0x50] sm:$0xff]
        %v569 = vld [vmem:[#allocation4 + $0x58] sm:$0xff]
        %v570 = vld [vmem:[#allocation4 + $0x60] sm:$0xff]
        %v571 = vld [vmem:[#allocation4 + $0x68] sm:$0xff]
        %v572 = vld [vmem:[#allocation4 + $0x70] sm:$0xff]
        %v573 = vld [vmem:[#allocation4 + $0x78] sm:$0xff]
        %v574 = vld [vmem:[%s3] sm:$0x1]
        %v576 = vlaneseq
        %v577 = vshrl.u32 %v576, 7
        %v578 = vsub.s32 0, %v577
        %v579 = vrot.slane %v574, %v578
        %581 = vmatprep.subr.mxu0 0.0
        %582 = vmatpush1.msra.mxu0 %v573
        %583 = vmatprep.subr.mxu0 0.0
        %584 = vmatpush1.msra.mxu0 %v572
        %585 = vmatprep.subr.mxu0 0.0
        %586 = vmatpush1.msra.mxu0 %v571
        %587 = vmatprep.subr.mxu0 0.0
        %588 = vmatpush1.msra.mxu0 %v570
        %589 = vmatprep.subr.mxu0 0.0
        %590 = vmatpush1.msra.mxu0 %v569
        %591 = vmatprep.subr.mxu0 0.0
        %592 = vmatpush1.msra.mxu0 %v568
        %593 = vmatprep.subr.mxu0 0.0
        %594 = vmatpush1.msra.mxu0 %v567
        %595 = vmatprep.subr.mxu0 0.0
        %596 = vmatpush1.msra.mxu0 %v566
        %597 = vmatprep.subr.mxu0 0.0
        %598 = vmatpush1.msra.mxu0 %v565
        %599 = vmatprep.subr.mxu0 0.0
        %600 = vmatpush1.msra.mxu0 %v564
        %601 = vmatprep.subr.mxu0 0.0
        %602 = vmatpush1.msra.mxu0 %v563
        %603 = vmatprep.subr.mxu0 0.0
        %604 = vmatpush1.msra.mxu0 %v562
        %605 = vmatprep.subr.mxu0 0.0
        %606 = vmatpush1.msra.mxu0 %v561
        %607 = vmatprep.subr.mxu0 0.0
        %608 = vmatpush1.msra.mxu0 %v560
        %609 = vmatprep.subr.mxu0 0.0
        %610 = vmatpush1.msra.mxu0 %v559
        %611 = vmatprep.subr.mxu0 0.0
        %612 = vmatpush1.msra.mxu0 %v558
        %613 = vmatprep.subr.mxu0 0.0
        %614 = vmatpush2.msra.mxu0 0.0
        %615 = vmatprep.subr.mxu0 0.0
        %616 = vmatpush2.msra.mxu0 0.0
        %617 = vmatprep.subr.mxu0 0.0
        %618 = vmatpush2.msra.mxu0 0.0
        %619 = vmatprep.subr.mxu0 0.0
        %620 = vmatpush2.msra.mxu0 0.0
        %621 = vmatprep.subr.mxu0 0.0
        %622 = vmatpush2.msra.mxu0 0.0
        %623 = vmatprep.subr.mxu0 0.0
        %624 = vmatpush2.msra.mxu0 0.0
        %625 = vmatprep.subr.mxu0 0.0
        %626 = vmatpush2.msra.mxu0 0.0
        %627 = vmatprep.subr.mxu0 0.0
        %628 = vmatpush2.msra.mxu0 0.0
        %629 = vmatprep.subr.mxu0 0.0
        %630 = vmatpush2.msra.mxu0 0.0
        %631 = vmatprep.subr.mxu0 0.0
        %632 = vmatpush2.msra.mxu0 0.0
        %633 = vmatprep.subr.mxu0 0.0
        %634 = vmatpush2.msra.mxu0 0.0
        %635 = vmatprep.subr.mxu0 0.0
        %636 = vmatpush2.msra.mxu0 0.0
        %637 = vmatprep.subr.mxu0 0.0
        %638 = vmatpush2.msra.mxu0 0.0
        %639 = vmatprep.subr.mxu0 0.0
        %640 = vmatpush2.msra.mxu0 0.0
        %641 = vmatprep.subr.mxu0 0.0
        %642 = vmatpush2.msra.mxu0 0.0
        %643 = vmatprep.subr.mxu0 0.0
        %644 = vmatpush2.msra.mxu0 0.0
        %645 = vmatprep.mubr.f32.mxu0 0.0
        %646 = vmatmul.mubr.f32.gmra.mxu0 %v556
        %v647 = vpop.f32.mrf.mxu0
        %v648 = vadd.f32 %v579, %v647
        %v649 = vpop.f32.mrf.mxu0
        %650 = vdwg.mxu0
        %v651 = vmax.f32 %v648, 0.0
        %v652 = vld [vmem:[%s4] sm:$0xff]
        %v653 = vld [vmem:[%s4 + $0x8] sm:$0xff]
        %v654 = vld [vmem:[%s4 + $0x10] sm:$0xff]
        %v655 = vld [vmem:[%s4 + $0x18] sm:$0xff]
        %v656 = vld [vmem:[%s4 + $0x20] sm:$0xff]
        %v657 = vld [vmem:[%s4 + $0x28] sm:$0xff]
        %v658 = vld [vmem:[%s4 + $0x30] sm:$0xff]
        %v659 = vld [vmem:[%s4 + $0x38] sm:$0xff]
        %v660 = vld [vmem:[%s4 + $0x40] sm:$0xff]
        %v661 = vld [vmem:[%s4 + $0x48] sm:$0xff]
        %v662 = vld [vmem:[%s4 + $0x50] sm:$0xff]
        %v663 = vld [vmem:[%s4 + $0x58] sm:$0xff]
        %v664 = vld [vmem:[%s4 + $0x60] sm:$0xff]
        %v665 = vld [vmem:[%s4 + $0x68] sm:$0xff]
        %v666 = vld [vmem:[%s4 + $0x70] sm:$0xff]
        %v667 = vld [vmem:[%s4 + $0x78] sm:$0xff]
        %v668 = vld [vmem:[%s4 + $0x80] sm:$0xff]
        %v669 = vld [vmem:[%s4 + $0x88] sm:$0xff]
        %v670 = vld [vmem:[%s4 + $0x90] sm:$0xff]
        %v671 = vld [vmem:[%s4 + $0x98] sm:$0xff]
        %v672 = vld [vmem:[%s4 + $0xa0] sm:$0xff]
        %v673 = vld [vmem:[%s4 + $0xa8] sm:$0xff]
        %v674 = vld [vmem:[%s4 + $0xb0] sm:$0xff]
        %v675 = vld [vmem:[%s4 + $0xb8] sm:$0xff]
        %v676 = vld [vmem:[%s4 + $0xc0] sm:$0xff]
        %v677 = vld [vmem:[%s4 + $0xc8] sm:$0xff]
        %v678 = vld [vmem:[%s4 + $0xd0] sm:$0xff]
        %v679 = vld [vmem:[%s4 + $0xd8] sm:$0xff]
        %v680 = vld [vmem:[%s4 + $0xe0] sm:$0xff]
        %v681 = vld [vmem:[%s4 + $0xe8] sm:$0xff]
        %v682 = vld [vmem:[%s4 + $0xf0] sm:$0xff]
        %v683 = vld [vmem:[%s4 + $0xf8] sm:$0xff]
        %v684 = vld [vmem:[%s5] sm:$0x3]
        %v686 = vlaneseq
        %v687 = vshrl.u32 %v686, 7
        %v688 = vsub.s32 0, %v687
        %v689 = vrot.slane %v684, %v688
        %v690 = vlaneseq
        %v691 = vshrl.u32 %v690, 7
        %v692 = vsub.s32 1, %v691
        %v693 = vrot.slane %v684, %v692
        %696 = vmatprep.subr.mxu0 %v683
        %697 = vmatpush1.msra.mxu0 %v682
        %698 = vmatprep.subr.mxu0 %v681
        %699 = vmatpush1.msra.mxu0 %v680
        %700 = vmatprep.subr.mxu0 %v679
        %701 = vmatpush1.msra.mxu0 %v678
        %702 = vmatprep.subr.mxu0 %v677
        %703 = vmatpush1.msra.mxu0 %v676
        %704 = vmatprep.subr.mxu0 %v675
        %705 = vmatpush1.msra.mxu0 %v674
        %706 = vmatprep.subr.mxu0 %v673
        %707 = vmatpush1.msra.mxu0 %v672
        %708 = vmatprep.subr.mxu0 %v671
        %709 = vmatpush1.msra.mxu0 %v670
        %710 = vmatprep.subr.mxu0 %v669
        %711 = vmatpush1.msra.mxu0 %v668
        %712 = vmatprep.subr.mxu0 %v667
        %713 = vmatpush1.msra.mxu0 %v666
        %714 = vmatprep.subr.mxu0 %v665
        %715 = vmatpush1.msra.mxu0 %v664
        %716 = vmatprep.subr.mxu0 %v663
        %717 = vmatpush1.msra.mxu0 %v662
        %718 = vmatprep.subr.mxu0 %v661
        %719 = vmatpush1.msra.mxu0 %v660
        %720 = vmatprep.subr.mxu0 %v659
        %721 = vmatpush1.msra.mxu0 %v658
        %722 = vmatprep.subr.mxu0 %v657
        %723 = vmatpush1.msra.mxu0 %v656
        %724 = vmatprep.subr.mxu0 %v655
        %725 = vmatpush1.msra.mxu0 %v654
        %726 = vmatprep.subr.mxu0 %v653
        %727 = vmatpush1.msra.mxu0 %v652
        %728 = vmatprep.subr.mxu0 0.0
        %729 = vmatpush2.msra.mxu0 0.0
        %730 = vmatprep.subr.mxu0 0.0
        %731 = vmatpush2.msra.mxu0 0.0
        %732 = vmatprep.subr.mxu0 0.0
        %733 = vmatpush2.msra.mxu0 0.0
        %734 = vmatprep.subr.mxu0 0.0
        %735 = vmatpush2.msra.mxu0 0.0
        %736 = vmatprep.subr.mxu0 0.0
        %737 = vmatpush2.msra.mxu0 0.0
        %738 = vmatprep.subr.mxu0 0.0
        %739 = vmatpush2.msra.mxu0 0.0
        %740 = vmatprep.subr.mxu0 0.0
        %741 = vmatpush2.msra.mxu0 0.0
        %742 = vmatprep.subr.mxu0 0.0
        %743 = vmatpush2.msra.mxu0 0.0
        %744 = vmatprep.subr.mxu0 0.0
        %745 = vmatpush2.msra.mxu0 0.0
        %746 = vmatprep.subr.mxu0 0.0
        %747 = vmatpush2.msra.mxu0 0.0
        %748 = vmatprep.subr.mxu0 0.0
        %749 = vmatpush2.msra.mxu0 0.0
        %750 = vmatprep.subr.mxu0 0.0
        %751 = vmatpush2.msra.mxu0 0.0
        %752 = vmatprep.subr.mxu0 0.0
        %753 = vmatpush2.msra.mxu0 0.0
        %754 = vmatprep.subr.mxu0 0.0
        %755 = vmatpush2.msra.mxu0 0.0
        %756 = vmatprep.subr.mxu0 0.0
        %757 = vmatpush2.msra.mxu0 0.0
        %758 = vmatprep.subr.mxu0 0.0
        %759 = vmatpush2.msra.mxu0 0.0
        %760 = vmatprep.mubr.f32.mxu0 0.0
        %761 = vmatmul.mubr.f32.gmra.mxu0 %v651
        %v762 = vpop.f32.mrf.mxu0
        %v763 = vadd.f32 %v689, %v762
        %v764 = vpop.f32.mrf.mxu0
        %v765 = vadd.f32 %v693, %v764
        %766 = vdwg.mxu0
        %v767 = vmax.f32 %v763, %v765
        %768 = vmax.xlane.f32.xlu0 %v767
        %v769 = vpop.xlane.xlu0 %768
        %v770 = vsub.f32 %v763, %v769
        %v771 = vsub.f32 %v765, %v769
        %v772 = vmul.f32 %v770, 1.442695
        %v773 = vpow.pop %v772
        %v774 = vmul.f32 %v771, 1.442695
        %v775 = vpow.pop %v774
        %v776 = vadd.f32 %v773, %v775
        %777 = vadd.xlane.f32.xlu0 %v776
        %v778 = vpop.xlane.xlu0 %777
        %v779 = vlog2.pop %v778
        %v780 = vmul.f32 %v779, 0.6931472
        %v781 = vadd.f32 %v780, %v769
        %v782 = vsub.f32 %v763, %v781
        %v783 = vsub.f32 %v765, %v781
        %784 = vst [vmem:[%s255] sm:$0xff] %v782
        %785 = vst [vmem:[%s255 + $0x8] sm:$0xff] %v783
        %s786 = sand.u32 %s145, 1
        %s787 = scalar_lea.sflag [#allocation6], %s786
        %s788 = sand.u32 %s145, 1
        %s789 = smul.addr %s788, 16
        %s790 = scalar_lea.vmem [#allocation7], %s789
        %s791 = sand.u32 %s171, 1
        %s792 = scalar_lea.sflag [#allocation9], %s791
        %s793 = sand.u32 %s171, 1
        %s794 = smul.addr %s793, 8
        %s795 = scalar_lea.vmem [#allocation8], %s794
        // Predicated region
        $region45: #{tpu_custom_call.1} parent=39 // pred_check
          %p796 = pneg %p155
        $region46: #{tpu_custom_call.1} parent=39 // pred_check_branch
          %798 = sbr.rel (%p796) target = $region48
        $region47: #{tpu_custom_call.1} parent=39 // pred_region
          %s800 = ssub.s32 256, 256
          %801 = vsyncadd %s787, %s800
          %s802 = smul.addr %s32, 2
          %s803 = smul.addr %s802, 128
          %s804 = scalar_lea.hbm %s6, %s803
          %s806 = sshll.u32 %s790, 4
          %s807 = int_to_ptr.vmem [resolvable:$true] %s806
          %809 = dma.vmem_to_hbm [thread:$0]  %s807, 256, %s804, %s787
        $region48: #{tpu_custom_call.1} parent=39 // pred_fallthru
          _
        // Predicated region
        $region49: #{tpu_custom_call.1} parent=39 // pred_check
          %p810 = pneg %p181
        $region50: #{tpu_custom_call.1} parent=39 // pred_check_branch
          %812 = sbr.rel (%p810) target = $region52
        $region51: #{tpu_custom_call.1} parent=39 // pred_region
          %s814 = ssub.s32 128, 128
          %815 = vsyncadd %s792, %s814
          %s816 = smul.addr %s32, 128
          %s817 = scalar_lea.hbm %s7, %s816
          %s819 = sshll.u32 %s795, 4
          %s820 = int_to_ptr.vmem [resolvable:$true] %s819
          %822 = dma.vmem_to_hbm [thread:$0]  %s820, 128, %s817, %s792
        $region52: #{tpu_custom_call.1} parent=39 // pred_fallthru
          _
      $region40: #{tpu_custom_call.1} parent=5 // pred_fallthru
        _
      %p823 = scmp.le.s32.totalorder 2, %s27
      // Predicated region
      $region53: #{tpu_custom_call.1} parent=5 // pred_check
        %p824 = pneg %p823
      $region54: #{tpu_custom_call.1} parent=5 // pred_check_branch
        %826 = sbr.rel (%p824) target = $region56
      $region55: #{tpu_custom_call.1} parent=5 // pred_region
        %s827 = ssub.s32 %s27, 2
        // Predicated region
        $region57: #{tpu_custom_call.1} parent=55 // pred_check
          %p828 = pneg %p161
        $region58: #{tpu_custom_call.1} parent=55 // pred_check_branch
          %830 = sbr.rel (%p828) target = $region60
        $region59: #{tpu_custom_call.1} parent=55 // pred_region
          %s831 = sand.u32 %s146, 1
          %s832 = scalar_lea.sflag [#allocation6], %s831
          %s833 = sand.u32 %s146, 1
          %s834 = smul.addr %s833, 16
          %s835 = scalar_lea.vmem [#allocation7], %s834
          %836 = dma.done %s832, 256
        $region60: #{tpu_custom_call.1} parent=55 // pred_fallthru
          _
        // Predicated region
        $region61: #{tpu_custom_call.1} parent=55 // pred_check
          %p837 = pneg %p187
        $region62: #{tpu_custom_call.1} parent=55 // pred_check_branch
          %839 = sbr.rel (%p837) target = $region64
        $region63: #{tpu_custom_call.1} parent=55 // pred_region
          %s840 = sand.u32 %s172, 1
          %s841 = scalar_lea.sflag [#allocation9], %s840
          %s842 = sand.u32 %s172, 1
          %s843 = smul.addr %s842, 8
          %s844 = scalar_lea.vmem [#allocation8], %s843
          %845 = dma.done %s841, 128
        $region64: #{tpu_custom_call.1} parent=55 // pred_fallthru
          _
      $region56: #{tpu_custom_call.1} parent=5 // pred_fallthru
        _
    $region6: #{tpu_custom_call.1} parent=1 // loop_footer
      %s31 = sadd.s32 1, %s27
    $region7: #{tpu_custom_call.1} parent=1 // loop_footer_branch
      %26 = sbr.rel target = $region3
    $region8: #{tpu_custom_call.1} parent=1 // loop_exit
      _
    %846 = vsyncpa [#allocation5], 1
    %s847 = scalar_lea.sflag [#allocation5], 1
    %848 = vsyncpa %s847, 1
    %849 = vsyncpa [#allocation6], 1
    %s850 = scalar_lea.sflag [#allocation6], 1
    %851 = vsyncpa %s850, 1
    %852 = vsyncpa [#allocation9], 1
    %s853 = scalar_lea.sflag [#allocation9], 1
    %854 = vsyncpa %s853, 1

</llo_original>
